<compile_context>
chip_gen: v5e
topology: v5e:2x2
jax: 0.10.0
libtpu: 0.0.40
codegen_flags: <defaults>
</compile_context>

<pallas_src>
import functools

import jax
import jax.numpy as jnp
from jax import lax
from jax.experimental import pallas as pl
from jax.experimental.pallas import tpu as pltpu

COLS_CANDIDATES = (1024, 512, 256, 128)   # lane-dense last dims (multiples of 128)
FALLBACK_COLS = 1024                      # only used for sizes not divisible by 128
MAX_BLOCK_ROWS = 512                      # 512*1024*4B = 2 MiB per f32 input block
VMEM_LIMIT_BYTES = 32 << 20               # lift v5e's 16 MiB default; safe on v6e/v7x


def _elementwise_loss(pred, target, sigma, *, alpha, beta, inv_beta_half,
                      loss_weight):
    diff = jnp.abs(pred - target)
    l1 = jnp.where(diff < beta, diff * diff * inv_beta_half, diff - 0.5 * beta)
    out = jnp.exp(-sigma) * l1 + alpha * sigma
    if loss_weight != 1.0:  # folded in-kernel; hidden under DMA
        out = out * loss_weight
    return out


def _partial_sum_kernel(pred_ref, tgt_ref, sig_ref, out_ref, *, alpha, beta,
                        inv_beta_half, block_rows, total_rows):
    loss = _elementwise_loss(
        pred_ref[...].astype(jnp.float32),
        tgt_ref[...].astype(jnp.float32),
        sig_ref[...].astype(jnp.float32),
        alpha=alpha, beta=beta, inv_beta_half=inv_beta_half, loss_weight=1.0)
    if total_rows % block_rows != 0:
        # Ragged last grid block: rows past `total_rows` hold undefined VMEM
        # data, so mask them (select, so garbage NaNs cannot propagate).
        row = (pl.program_id(0) * block_rows
               + lax.broadcasted_iota(jnp.int32, loss.shape, 0))
        loss = jnp.where(row < total_rows, loss, 0.0)
    # One full reduce per (large) block; tiny (1,1) partial goes to SMEM.
    out_ref[0, 0] = jnp.sum(loss)


def _none_kernel(pred_ref, tgt_ref, sig_ref, out_ref, *, alpha, beta,
                 inv_beta_half, loss_weight):
    loss = _elementwise_loss(
        pred_ref[...].astype(jnp.float32),
        tgt_ref[...].astype(jnp.float32),
        sig_ref[...].astype(jnp.float32),
        alpha=alpha, beta=beta, inv_beta_half=inv_beta_half,
        loss_weight=loss_weight)
    # Lane-dense, unmasked stores; out-of-range rows of a partial last block
    # are never written back to HBM by Pallas.
    out_ref[...] = loss.astype(out_ref.dtype)


def _choose_layout(n):
    """Pick (cols, rows, padded). Zero-copy (rows*cols == n) whenever possible."""
    for cols in COLS_CANDIDATES:
        if n % cols == 0:
            return cols, n // cols, False
    # Rare sizes (n not a multiple of 128): zero-pad the tail row only.
    return FALLBACK_COLS, pl.cdiv(n, FALLBACK_COLS), True


def _choose_block_rows(rows):
    if rows <= 8:
        return rows  # single tiny block; block dim == full array dim is legal
    # Guarantee >= 2 grid steps (DMA/compute overlap, v7x megacore sharding),
    # capped at MAX_BLOCK_ROWS and rounded up to a sublane multiple.
    half = pl.cdiv(rows, 2)
    return min(MAX_BLOCK_ROWS, ((half + 7) // 8) * 8)


def _as_slab(x, rows, cols, n, padded):
    flat = jnp.ravel(x)  # zero-copy view of a contiguous array
    if padded:
        # TODO(synk): fallback full-copy pad for sizes not divisible by 128.
        flat = jnp.pad(flat, (0, rows * cols - n))
    return flat.reshape(rows, cols)


def uncertain_smooth_l1_loss_pallas(pred, target, sigma, *, alpha=1.0,
                                    beta=1.0, reduction='mean',
                                    loss_weight=1.0, avg_factor=None):
    assert beta > 0
    assert pred.shape == target.shape == sigma.shape
    assert reduction in ('none', 'sum', 'mean')

    n = int(pred.size)
    assert n > 0

    inv_beta_half = 0.5 / beta
    cols, rows, padded = _choose_layout(n)
    block_rows = _choose_block_rows(rows)
    num_blocks = pl.cdiv(rows, block_rows)
    grid = (num_blocks,)

    pred2 = _as_slab(pred, rows, cols, n, padded)
    tgt2 = _as_slab(target, rows, cols, n, padded)
    sig2 = _as_slab(sigma, rows, cols, n, padded)

    tile_spec = pl.BlockSpec((block_rows, cols), lambda i: (i, 0))
    cparams = pltpu.CompilerParams(dimension_semantics=("parallel",),
                                   vmem_limit_bytes=VMEM_LIMIT_BYTES)

    if reduction == 'none':
        out = pl.pallas_call(
            functools.partial(_none_kernel, alpha=alpha, beta=beta,
                              inv_beta_half=inv_beta_half,
                              loss_weight=loss_weight),
            out_shape=jax.ShapeDtypeStruct((rows, cols), pred.dtype),
            grid_spec=pltpu.PrefetchScalarGridSpec(
                num_scalar_prefetch=0,
                grid=grid,
                in_specs=[tile_spec, tile_spec, tile_spec],
                out_specs=tile_spec),
            compiler_params=cparams,
        )(pred2, tgt2, sig2)
        if padded:
            out = out.reshape(-1)[:n]
        return out.reshape(pred.shape)

    # 'sum' / 'mean': per-block f32 partial sums (megacore-friendly parallel
    # grid), tiny final reduce done in JAX.
    partials = pl.pallas_call(
        functools.partial(_partial_sum_kernel, alpha=alpha, beta=beta,
                          inv_beta_half=inv_beta_half,
                          block_rows=block_rows, total_rows=rows),
        out_shape=jax.ShapeDtypeStruct((num_blocks, 1), jnp.float32),
        grid_spec=pltpu.PrefetchScalarGridSpec(
            num_scalar_prefetch=0,
            grid=grid,
            in_specs=[tile_spec, tile_spec, tile_spec],
            out_specs=pl.BlockSpec((1, 1), lambda i: (i, 0),
                                   memory_space=pltpu.SMEM)),
        compiler_params=cparams,
    )(pred2, tgt2, sig2)

    total = jnp.sum(partials)
    if reduction == 'mean':
        denom = jnp.float32(n if avg_factor is None else avg_factor)
        total = total / denom
    # Match the PyTorch reference dtype semantics (f32 accumulation inside).
    return (loss_weight * total).astype(pred.dtype)


class UncertainSmoothL1Loss:
    """JAX/Pallas re-implementation of mmdet3d UncertainSmoothL1Loss."""

    def __init__(self, alpha=1.0, beta=1.0, reduction='mean', loss_weight=1.0):
        assert reduction in ['none', 'sum', 'mean']
        self.alpha = alpha
        self.beta = beta
        self.reduction = reduction
        self.loss_weight = loss_weight

    def __call__(self, pred, target, sigma, weight=None, avg_factor=None,
                 reduction_override=None):
        assert reduction_override in (None, 'none', 'mean', 'sum')
        reduction = reduction_override if reduction_override else self.reduction
        # TODO(synk): per-element `weight` tensor path not implemented (weight=None only).
        assert weight is None
        return uncertain_smooth_l1_loss_pallas(
            pred, target, sigma,
            alpha=self.alpha, beta=self.beta,
            reduction=reduction, loss_weight=self.loss_weight,
            avg_factor=avg_factor)


def _reference(pred, target, sigma, alpha=1.0, beta=1.0, reduction='mean',
               loss_weight=1.0):
    diff = jnp.abs(pred - target)
    loss = jnp.where(diff < beta, 0.5 * diff * diff / beta, diff - 0.5 * beta)
    loss = jnp.exp(-sigma) * loss + alpha * sigma
    if reduction == 'mean':
        loss = jnp.mean(loss)
    elif reduction == 'sum':
        loss = jnp.sum(loss)
    return loss_weight * loss


if __name__ == "__main__":
    key = jax.random.PRNGKey(0)
    k1, k2, k3 = jax.random.split(key, 3)
    shape = (2, 4, 16, 16)  # NCHW-style elementwise prediction tensor
    pred = jax.random.normal(k1, shape, dtype=jnp.float32)
    target = jax.random.normal(k2, shape, dtype=jnp.float32)
    sigma = 0.1 * jax.random.normal(k3, shape, dtype=jnp.float32)

    loss_mod = UncertainSmoothL1Loss(alpha=1.0, beta=1.0, reduction='mean',
                                     loss_weight=1.0)

    # 'mean'
    out = jax.block_until_ready(loss_mod(pred, target, sigma))
    ref = _reference(pred, target, sigma)
    assert jnp.allclose(out, ref, rtol=1e-5, atol=1e-5), (out, ref)

    # 'sum'
    out_sum = jax.block_until_ready(
        loss_mod(pred, target, sigma, reduction_override='sum'))
    ref_sum = _reference(pred, target, sigma, reduction='sum')
    assert jnp.allclose(out_sum, ref_sum, rtol=1e-5, atol=1e-5), (out_sum, ref_sum)

    # 'none'
    out_none = jax.block_until_ready(
        loss_mod(pred, target, sigma, reduction_override='none'))
    ref_none = _reference(pred, target, sigma, reduction='none')
    assert jnp.allclose(out_none, ref_none, rtol=1e-5, atol=1e-5)

    # loss_weight folded in-kernel ('none' path) still matches.
    loss_mod_w = UncertainSmoothL1Loss(alpha=1.0, beta=1.0, reduction='none',
                                       loss_weight=0.5)
    out_w = jax.block_until_ready(loss_mod_w(pred, target, sigma))
    ref_w = _reference(pred, target, sigma, reduction='none', loss_weight=0.5)
    assert jnp.allclose(out_w, ref_w, rtol=1e-5, atol=1e-5)

    print("KERNEL_OK")
</pallas_src>

<mosaic_0001>
module attributes {stable_mosaic.version = 11 : i64} {
  func.func @_partial_sum_kernel(%arg0: i32, %arg1: memref<2x1024xf32, #tpu.memory_space<vmem>>, %arg2: memref<2x1024xf32, #tpu.memory_space<vmem>>, %arg3: memref<2x1024xf32, #tpu.memory_space<vmem>>, %arg4: memref<1x1xf32, #tpu.memory_space<smem>>) attributes {dimension_semantics = [#tpu.dimension_semantics<parallel>], iteration_bounds = array<i64: 1>, scalar_prefetch = 0 : i64, scratch_operands = 0 : i64, tpu.core_type = #tpu.core_type<tc>, window_params = [{transform_indices = @transform_0, window_bounds = array<i64: 2, 1024>}, {transform_indices = @transform_1, window_bounds = array<i64: 2, 1024>}, {transform_indices = @transform_2, window_bounds = array<i64: 2, 1024>}, {transform_indices = @transform_3, window_bounds = array<i64: 1, 1>}]} {
    %c0 = arith.constant 0 : index
    %c0_0 = arith.constant 0 : index
    %0 = vector.load %arg1[%c0, %c0_0] : memref<2x1024xf32, #tpu.memory_space<vmem>>, vector<2x1024xf32>
    %c0_1 = arith.constant 0 : index
    %c0_2 = arith.constant 0 : index
    %1 = vector.load %arg2[%c0_1, %c0_2] : memref<2x1024xf32, #tpu.memory_space<vmem>>, vector<2x1024xf32>
    %c0_3 = arith.constant 0 : index
    %c0_4 = arith.constant 0 : index
    %2 = vector.load %arg3[%c0_3, %c0_4] : memref<2x1024xf32, #tpu.memory_space<vmem>>, vector<2x1024xf32>
    %3 = arith.subf %0, %1 : vector<2x1024xf32>
    %4 = math.absf %3 : vector<2x1024xf32>
    %cst = arith.constant 1.000000e+00 : f32
    %5 = vector.broadcast %cst : f32 to vector<2x1024xf32>
    %6 = arith.cmpf olt, %4, %5 : vector<2x1024xf32>
    %7 = arith.mulf %4, %4 : vector<2x1024xf32>
    %cst_5 = arith.constant 5.000000e-01 : f32
    %8 = vector.broadcast %cst_5 : f32 to vector<2x1024xf32>
    %9 = arith.mulf %7, %8 : vector<2x1024xf32>
    %cst_6 = arith.constant 5.000000e-01 : f32
    %10 = vector.broadcast %cst_6 : f32 to vector<2x1024xf32>
    %11 = arith.subf %4, %10 : vector<2x1024xf32>
    %12 = arith.select %6, %9, %11 : vector<2x1024xi1>, vector<2x1024xf32>
    %cst_7 = arith.constant 0.000000e+00 : f32
    %13 = vector.broadcast %cst_7 : f32 to vector<2x1024xf32>
    %14 = arith.subf %13, %2 : vector<2x1024xf32>
    %15 = math.exp %14 : vector<2x1024xf32>
    %16 = arith.mulf %15, %12 : vector<2x1024xf32>
    %cst_8 = arith.constant 1.000000e+00 : f32
    %17 = vector.broadcast %cst_8 : f32 to vector<2x1024xf32>
    %18 = arith.mulf %17, %2 : vector<2x1024xf32>
    %19 = arith.addf %16, %18 : vector<2x1024xf32>
    %20 = vector.shape_cast %19 : vector<2x1024xf32> to vector<1x2x1024xf32>
    %cst_9 = arith.constant dense<0.000000e+00> : vector<1xf32>
    %21 = vector.multi_reduction <add>, %20, %cst_9 [1, 2] : vector<1x2x1024xf32> to vector<1xf32>
    %22 = vector.shape_cast %21 : vector<1xf32> to vector<1x1x1xf32>
    %23 = vector.extract %22[0, 0, 0] : f32 from vector<1x1x1xf32>
    %c0_10 = arith.constant 0 : index
    %c0_11 = arith.constant 0 : index
    %24 = memref.load %arg4[%c0_10, %c0_11] : memref<1x1xf32, #tpu.memory_space<smem>>
    memref.store %23, %arg4[%c0_10, %c0_11] : memref<1x1xf32, #tpu.memory_space<smem>>
    return
  }
  func.func @transform_0(%arg0: i32) -> (i32, i32) {
    %c0_i32 = arith.constant 0 : i32
    %c0_i32_0 = arith.constant 0 : i32
    return %arg0, %c0_i32 : i32, i32
  }
  func.func @transform_1(%arg0: i32) -> (i32, i32) {
    %c0_i32 = arith.constant 0 : i32
    %c0_i32_0 = arith.constant 0 : i32
    return %arg0, %c0_i32 : i32, i32
  }
  func.func @transform_2(%arg0: i32) -> (i32, i32) {
    %c0_i32 = arith.constant 0 : i32
    %c0_i32_0 = arith.constant 0 : i32
    return %arg0, %c0_i32 : i32, i32
  }
  func.func @transform_3(%arg0: i32) -> (i32, i32) {
    %c0_i32 = arith.constant 0 : i32
    %c0_i32_0 = arith.constant 0 : i32
    return %arg0, %c0_i32 : i32, i32
  }
}

</mosaic_0001>

<llo_original>
// kernel: tpu_custom_call.1
$region0: #{tpu_custom_call.1}
  #allocation0 [shape = 'u32[]', space=smem, size = 0x4, offset = 0x4, fixed_abs, tag = 'smem constant byte address 0x4 - core index']
  #allocation1 [shape = 'u32[72,128]{1,0:T(1,128)}', space=vmem, size = 0x9000, scoped, tag = 'internal scratch']
  %s0 = inlined_call_operand.hbm [shape: f32[2,1024], index: 0, kind: input, shape index: {}]
  %s1 = inlined_call_operand.hbm [shape: f32[2,1024], index: 1, kind: input, shape index: {}]
  %s2 = inlined_call_operand.hbm [shape: f32[2,1024], index: 2, kind: input, shape index: {}]
  %s3 = inlined_call_operand.hbm [shape: f32[1,1], index: 3, kind: output, shape index: {}]
  %s4 = sld [smem:[#allocation0]]
  $region34: #{tpu_custom_call.1} parent=0
    _
  %s6 = ssub.s32 1, %s4
  %s7 = scalar_select 0, %s6, %s4
  $region1: #{tpu_custom_call.1} parent=0
    #allocation2 [shape = 'u8[8192]{0}', space=vmem, size = 0x2000, scoped, tag = 'input window, operand 0, single buffered']
    #allocation3 [shape = 's32[1]{0}', space=sflag, size = 0x4, scoped, tag = 'scoped memory for tpu_custom_call.1']
    #allocation4 [shape = 's32[1]{0}', space=sflag, size = 0x4, scoped, tag = 'scoped memory for tpu_custom_call.1']
    #allocation5 [shape = 'u8[8192]{0}', space=vmem, size = 0x2000, scoped, tag = 'input window, operand 1, single buffered']
    #allocation6 [shape = 's32[1]{0}', space=sflag, size = 0x4, scoped, tag = 'scoped memory for tpu_custom_call.1']
    #allocation7 [shape = 'u8[8192]{0}', space=vmem, size = 0x2000, scoped, tag = 'input window, operand 2, single buffered']
    #allocation8 [shape = 'u8[512]{0}', space=smem, size = 0x200, scoped, tag = 'output window, operand 0, single buffered']
    %8 = vsyncpa [#allocation3], 0
    %9 = vsyncpa [#allocation6], 0
    %10 = vsyncpa [#allocation4], 0
    // Predicated region
    $region2: #{tpu_custom_call.1} parent=1 // pred_check
      _
    $region3: #{tpu_custom_call.1} parent=1 // pred_check_branch
      %12 = sbr.rel (0) target = $region5
    $region4: #{tpu_custom_call.1} parent=1 // pred_region
      %14 = vsyncadd [#allocation3], 0
      %s16 = sshll.u32 %s0, 4
      %s17 = int_to_ptr.hbm [resolvable:$true] %s16
      %s18 = sshll.u32 [#allocation2], 4
      %s19 = int_to_ptr.vmem [resolvable:$true] %s18
      %21 = dma.hbm_to_vmem [thread:$0]  %s17, 256, %s19, [#allocation3]
    $region5: #{tpu_custom_call.1} parent=1 // pred_fallthru
      _
    // Predicated region
    $region6: #{tpu_custom_call.1} parent=1 // pred_check
      _
    $region7: #{tpu_custom_call.1} parent=1 // pred_check_branch
      %23 = sbr.rel (0) target = $region9
    $region8: #{tpu_custom_call.1} parent=1 // pred_region
      %25 = vsyncadd [#allocation6], 0
      %s27 = sshll.u32 %s1, 4
      %s28 = int_to_ptr.hbm [resolvable:$true] %s27
      %s29 = sshll.u32 [#allocation5], 4
      %s30 = int_to_ptr.vmem [resolvable:$true] %s29
      %32 = dma.hbm_to_vmem [thread:$0]  %s28, 256, %s30, [#allocation6]
    $region9: #{tpu_custom_call.1} parent=1 // pred_fallthru
      _
    // Predicated region
    $region10: #{tpu_custom_call.1} parent=1 // pred_check
      _
    $region11: #{tpu_custom_call.1} parent=1 // pred_check_branch
      %34 = sbr.rel (0) target = $region13
    $region12: #{tpu_custom_call.1} parent=1 // pred_region
      %36 = vsyncadd [#allocation6], 0
      %s38 = sshll.u32 %s2, 4
      %s39 = int_to_ptr.hbm [resolvable:$true] %s38
      %s40 = sshll.u32 [#allocation7], 4
      %s41 = int_to_ptr.vmem [resolvable:$true] %s40
      %43 = dma.hbm_to_vmem [thread:$0]  %s39, 256, %s41, [#allocation6]
    $region13: #{tpu_custom_call.1} parent=1 // pred_fallthru
      _
    // Predicated region
    $region14: #{tpu_custom_call.1} parent=1 // pred_check
      _
    $region15: #{tpu_custom_call.1} parent=1 // pred_check_branch
      %45 = sbr.rel (0) target = $region17
    $region16: #{tpu_custom_call.1} parent=1 // pred_region
      %47 = dma.done [#allocation3], 256
    $region17: #{tpu_custom_call.1} parent=1 // pred_fallthru
      _
    // Predicated region
    $region18: #{tpu_custom_call.1} parent=1 // pred_check
      _
    $region19: #{tpu_custom_call.1} parent=1 // pred_check_branch
      %49 = sbr.rel (0) target = $region21
    $region20: #{tpu_custom_call.1} parent=1 // pred_region
      %51 = dma.done [#allocation6], 256
    $region21: #{tpu_custom_call.1} parent=1 // pred_fallthru
      _
    // Predicated region
    $region22: #{tpu_custom_call.1} parent=1 // pred_check
      _
    $region23: #{tpu_custom_call.1} parent=1 // pred_check_branch
      %53 = sbr.rel (0) target = $region25
    $region24: #{tpu_custom_call.1} parent=1 // pred_region
      %55 = dma.done [#allocation6], 256
    $region25: #{tpu_custom_call.1} parent=1 // pred_fallthru
      _
    %v56 = vld [vmem:[#allocation2] sm:$0xff]
    %v57 = vld [vmem:[#allocation2 + $0x8] sm:$0xff]
    %v58 = vld [vmem:[#allocation5] sm:$0xff]
    %v59 = vld [vmem:[#allocation5 + $0x8] sm:$0xff]
    %v60 = vld [vmem:[#allocation7] sm:$0xff]
    %v61 = vld [vmem:[#allocation7 + $0x8] sm:$0xff]
    %v62 = vsub.f32 %v56, %v58
    %v63 = vsub.f32 %v57, %v59
    %v64 = vand.u32 2147483647, %v62
    %v65 = vand.u32 2147483647, %v63
    %vm66 = vcmp.lt.f32.partialorder %v64, 1.0
    %vm67 = vcmp.lt.f32.partialorder %v65, 1.0
    %v68 = vmul.f32 %v64, %v64
    %v69 = vmul.f32 %v65, %v65
    %v70 = vmul.f32 %v68, 0.5
    %v71 = vmul.f32 %v69, 0.5
    %v72 = vsub.f32 %v64, 0.5
    %v73 = vsub.f32 %v65, 0.5
    %v74 = vsel %vm66, %v70, %v72
    %v75 = vsel %vm67, %v71, %v73
    %v76 = vsub.f32 0.0, %v60
    %v77 = vsub.f32 0.0, %v61
    %v78 = vmul.f32 %v76, 1.442695
    %v79 = vpow.pop %v78
    %v80 = vmul.f32 %v77, 1.442695
    %v81 = vpow.pop %v80
    %v82 = vmul.f32 %v79, %v74
    %v83 = vmul.f32 %v81, %v75
    %v84 = vadd.f32 %v82, %v60
    %v85 = vadd.f32 %v83, %v61
    %88 = vst [vmem:[#allocation1] ss:$4 sm:$0xff] %v84
    %s89 = scalar_lea.vmem [#allocation1], 32
    %90 = vst [vmem:[%s89] ss:$4 sm:$0xff] %v85
    %v91 = vld.sshfl [vmem:[#allocation1] sm:$0xff pattern:$0x73625140]
    %v92 = vld.sshfl [vmem:[#allocation1 + $0x8] sm:$0xff pattern:$0x73625140]
    %v93 = vld.sshfl [vmem:[#allocation1 + $0x10] sm:$0xff pattern:$0x73625140]
    %v94 = vld.sshfl [vmem:[#allocation1 + $0x18] sm:$0xff pattern:$0x73625140]
    %v95 = vld.sshfl [vmem:[#allocation1 + $0x20] sm:$0xff pattern:$0x73625140]
    %v96 = vld.sshfl [vmem:[#allocation1 + $0x28] sm:$0xff pattern:$0x73625140]
    %v97 = vld.sshfl [vmem:[#allocation1 + $0x30] sm:$0xff pattern:$0x73625140]
    %v98 = vld.sshfl [vmem:[#allocation1 + $0x38] sm:$0xff pattern:$0x73625140]
    %vm107 = vcmask 1041408
    %v108 = vsel %vm107, %v91, 0.0
    %v109 = vsel %vm107, %v92, 0.0
    %v110 = vadd.f32 %v108, %v109
    %v111 = vsel %vm107, %v93, 0.0
    %v112 = vadd.f32 %v110, %v111
    %v113 = vsel %vm107, %v94, 0.0
    %v114 = vadd.f32 %v112, %v113
    %v115 = vsel %vm107, %v95, 0.0
    %v116 = vadd.f32 %v114, %v115
    %v117 = vsel %vm107, %v96, 0.0
    %v118 = vadd.f32 %v116, %v117
    %v119 = vsel %vm107, %v97, 0.0
    %v120 = vadd.f32 %v118, %v119
    %v121 = vsel %vm107, %v98, 0.0
    %v122 = vadd.f32 %v120, %v121
    %123 = vadd.xlane.f32.xlu0 %v122
    %v124 = vpop.xlane.xlu0 %123
    %v125 = vrot.slane %v124, 4
    %v126 = vadd.f32 %v124, %v125
    %v127 = vrot.slane %v126, 2
    %v128 = vadd.f32 %v126, %v127
    %v129 = vrot.slane %v128, 1
    %v130 = vadd.f32 %v128, %v129
    %s131 = vtos %v130
    %s132 = scalar_lea.smem [#allocation8], 0
    %133 = sst [smem:[%s132]] %s131
    // Predicated region
    $region26: #{tpu_custom_call.1} parent=1 // pred_check
      _
    $region27: #{tpu_custom_call.1} parent=1 // pred_check_branch
      %135 = sbr.rel (0) target = $region29
    $region28: #{tpu_custom_call.1} parent=1 // pred_region
      %137 = vsyncadd [#allocation4], 0
      %s139 = sshll.u32 %s3, 4
      %s140 = int_to_ptr.hbm [resolvable:$true] %s139
      %142 = dma.smem_to_hbm [#allocation8], 16, %s140, [#allocation4]
    $region29: #{tpu_custom_call.1} parent=1 // pred_fallthru
      _
    // Predicated region
    $region30: #{tpu_custom_call.1} parent=1 // pred_check
      _
    $region31: #{tpu_custom_call.1} parent=1 // pred_check_branch
      %144 = sbr.rel (0) target = $region33
    $region32: #{tpu_custom_call.1} parent=1 // pred_region
      %146 = dma.done [#allocation4], 16
    $region33: #{tpu_custom_call.1} parent=1 // pred_fallthru
      _
    %147 = sfence
    %148 = vsyncpa [#allocation3], 1
    %149 = vsyncpa [#allocation6], 1
    %150 = vsyncpa [#allocation4], 1

</llo_original>
